<compile_context>
chip_gen: v5e
topology: v5e:2x2
jax: 0.10.0
libtpu: 0.0.40
codegen_flags: <defaults>
</compile_context>

<pallas_src>
import math
import jax
import jax.numpy as jnp
from jax import lax
from jax.experimental import pallas as pl
from jax.experimental.pallas import tpu as pltpu

BN_EPS = 1e-5
HP = jax.lax.Precision.HIGHEST      # wrapper-side constant folding in full f32
_NETWORK_IS_AFFINE = True           # no LeakyReLU anywhere in this forward


# --------------------------------------------------------------------------- #
# Kernel: one grid step = TB samples, one MXU GEMV, one lane-dense row store.
# --------------------------------------------------------------------------- #
def _gemv_kernel(x_ref, w_ref, b_ref, out_ref):
    """x_ref   : (TB, d*d)  bf16   input tile (samples along sublanes)
       w_ref   : (8, d*d)   bf16   W_total^T replicated across 8 sublane rows
       b_ref   : (1, 1)     f32    fully folded bias (SMEM scalar)
       out_ref : (1, TB)    f32    lane-dense output row for this tile
    """
    # A @ B^T contraction (same dimension numbers as the flash q.k^T pattern):
    # acc[r, t] = sum_k w[r, k] * x[t, k]; all 8 rows are identical by
    # construction.  bf16 x bf16 on the MXU with f32 accumulation (deliberate).
    acc = lax.dot_general(
        w_ref[...], x_ref[...],
        dimension_numbers=(((1,), (1,)), ((), ())),
        preferred_element_type=jnp.float32)                       # (8, TB)
    out_ref[...] = acc[0:1, :] + b_ref[0, 0]                      # (1, TB)


# --------------------------------------------------------------------------- #
# Wrapper-side weight folding (one time, f32 HIGHEST).
# --------------------------------------------------------------------------- #
def _fold_params(params, d):
    """Collapse the affine BCNN (E2E -> E2N -> N2G -> BN(eval) -> fc) into one
    GEMV.  Returns (w8, b11): w8 (8, d*d) bf16 with identical rows and b11
    (1,1) f32 so that out[b] = x_flat[b] . w8[0] + b11."""
    assert _NETWORK_IS_AFFINE, "full GEMV collapse is only valid without activations"
    e2e = params["e2e_row_w"].shape[0]
    n2g = params["n2g_w"].shape[0]

    wr1 = params["e2e_row_w"][:, 0, 0, :]                    # (e2e, d)
    wc1 = params["e2e_col_w"][:, 0, :, 0]                    # (e2e, d)
    br1 = params["e2e_row_b"]                                # (e2e,)
    bc1 = params["e2e_col_b"]                                # (e2e,)
    wr2 = params["e2n_row_w"][:, :, 0, :]                    # (e2n, e2e, d)
    wc2 = params["e2n_col_w"][:, :, :, 0]                    # (e2n, e2e, d)
    br2 = params["e2n_row_b"]                                # (e2n,)
    bc2 = params["e2n_col_b"]                                # (e2n,)
    wn = params["n2g_w"][:, :, :, 0]                         # (n2g, e2n, d)
    bn_b = params["n2g_b"]                                   # (n2g,)
    wfc = params["fc_w"]                                     # (1, n2g)
    bfc = params["fc_b"]                                     # (1,)

    # ---- Edge2Node folded into Node2Graph (same derivation as v2) ----
    sr = jnp.sum(wr2, axis=-1)                               # (e2n, e2e)
    sc = jnp.sum(wc2, axis=-1)                               # (e2n, e2e)
    wns = jnp.sum(wn, axis=-1)                               # (n2g, e2n)
    pr = (jnp.einsum("hgk,gf->hfk", wn, sr, precision=HP)
          + jnp.einsum("hg,gfk->hfk", wns, wc2, precision=HP))   # (n2g, e2e, d)
    pc = (jnp.einsum("hgk,gf->hfk", wn, sc, precision=HP)
          + jnp.einsum("hg,gfk->hfk", wns, wr2, precision=HP))   # (n2g, e2e, d)
    c_vec = (jnp.einsum("hg,g->h", wns, br2 + bc2, precision=HP) + bn_b
             + jnp.einsum("hfk,f->h", pr, br1, precision=HP)
             + jnp.einsum("hfk,f->h", pc, bc1, precision=HP))    # (n2g,)

    # ---- Edge2Edge (1,d)/(d,1) convs as dense (d*d, d*e2e) matmuls ----
    eye = jnp.eye(d, dtype=jnp.float32)
    wrow = (eye[:, None, :, None] * wr1.T[None, :, None, :]).reshape(d * d, d * e2e)
    wcol = (eye[None, :, :, None] * wc1.T[:, None, None, :]).reshape(d * d, d * e2e)
    prt = jnp.transpose(pr, (2, 1, 0)).reshape(d * e2e, n2g)
    pct = jnp.transpose(pc, (2, 1, 0)).reshape(d * e2e, n2g)

    # ---- BatchNorm1d (eval, running stats + affine) folded into fc ----
    inv_std = 1.0 / jnp.sqrt(params["bn_var"] + BN_EPS)
    bn_scale = params["bn_gamma"] * inv_std
    wfc_s = (wfc[0] * bn_scale).reshape(n2g, 1)
    bfc_s = bfc[0] + jnp.sum(wfc[0] * (params["bn_beta"]
                                       - params["bn_mean"] * bn_scale))

    # ---- review #1 + #2: concat stage-1, stack stage-2, fold fc, then the
    #      whole affine chain collapses to a single (d*d, 1) GEMV weight ----
    w_cat = jnp.concatenate([wrow, wcol], axis=1)            # (d*d, 2*d*e2e)
    p_cat = jnp.concatenate([prt, pct], axis=0)              # (2*d*e2e, n2g)
    p_fc = jnp.dot(p_cat, wfc_s, precision=HP)               # (2*d*e2e, 1)
    w_tot = jnp.dot(w_cat, p_fc, precision=HP)               # (d*d, 1)
    b_tot = jnp.dot(c_vec.reshape(1, n2g), wfc_s, precision=HP) + bfc_s  # (1,1)

    # bf16 weight replicated over 8 sublane rows -> native MXU operand tile;
    # row 0 of the product is the answer.
    w8 = jnp.tile(w_tot.reshape(1, d * d), (8, 1)).astype(jnp.bfloat16)
    return w8, b_tot.astype(jnp.float32)


def _auto_tb(batch):
    """Review #3: TB >= 128 so the MXU/grid overhead is amortized; review #4:
    keep >= 4 grid steps so the 'parallel' axis can feed both v7x TensorCores."""
    for tb in (1024, 512, 256, 128):
        if pl.cdiv(batch, tb) >= 4:
            return tb
    if batch >= 128:
        return 128
    return max(16, 16 * pl.cdiv(batch, 16))    # tiny-batch fallback (1 step)


def bcnn_forward(x, params, *, tb=None):
    """x: (B, 1, d, d) float32 -> (B, 1) float32 (eval-mode forward)."""
    B, C, d, d2 = x.shape
    assert C == 1 and d == d2
    dd = d * d

    w8, b_tot = _fold_params(params, d)

    if tb is None:
        tb = _auto_tb(B)
    assert tb % 16 == 0, "TB must be a multiple of 16 (bf16 sublane packing)"

    # x: free metadata reshape + bf16 cast (halves the dominant HBM stream; in
    # production supply x already in bf16 so the cast pass disappears).
    xf = x.reshape(B, dd).astype(jnp.bfloat16)
    n_tiles = pl.cdiv(B, tb)
    b_pad = n_tiles * tb
    if b_pad != B:
        xf = jnp.pad(xf, ((0, b_pad - B), (0, 0)))

    out = pl.pallas_call(
        _gemv_kernel,
        out_shape=jax.ShapeDtypeStruct((1, b_pad), jnp.float32),  # lane-dense
        grid=(n_tiles,),
        in_specs=[
            pl.BlockSpec((tb, dd), lambda t: (t, 0)),             # x tile (bf16)
            pl.BlockSpec((8, dd), lambda t: (0, 0)),              # resident weight
            pl.BlockSpec(memory_space=pltpu.MemorySpace.SMEM),    # scalar bias
        ],
        out_specs=pl.BlockSpec((1, tb), lambda t: (0, t)),        # (1, TB) row
        compiler_params=pltpu.CompilerParams(
            dimension_semantics=("parallel",)),                   # v7x megacore
    )(xf, w8, b_tot)

    # padded columns B..b_pad hold bias-only garbage; slice them off (no alias).
    return out[0, :B].reshape(B, 1)


# --------------------------------------------------------------------------- #
# Pure-JAX literal reference (PyTorch forward, eval mode) + param init.
# --------------------------------------------------------------------------- #
def bcnn_reference(x, params):
    x2 = x[:, 0]
    wr1 = params["e2e_row_w"][:, 0, 0, :]
    wc1 = params["e2e_col_w"][:, 0, :, 0]
    row1 = jnp.einsum("bij,fj->bfi", x2, wr1) + params["e2e_row_b"][None, :, None]
    col1 = jnp.einsum("bij,fi->bfj", x2, wc1) + params["e2e_col_b"][None, :, None]
    y1 = row1[:, :, :, None] + col1[:, :, None, :]                   # (B,e2e,d,d)
    wr2 = params["e2n_row_w"][:, :, 0, :]
    wc2 = params["e2n_col_w"][:, :, :, 0]
    row2 = jnp.einsum("bfij,gfj->bgi", y1, wr2) + params["e2n_row_b"][None, :, None]
    col2 = jnp.einsum("bfij,gfi->bgj", y1, wc2) + params["e2n_col_b"][None, :, None]
    y2 = row2 + col2                                                 # (B,e2n,d)
    wn = params["n2g_w"][:, :, :, 0]
    g = jnp.einsum("bgi,hgi->bh", y2, wn) + params["n2g_b"][None, :]  # Node2Graph
    z = ((g - params["bn_mean"][None, :])
         / jnp.sqrt(params["bn_var"][None, :] + BN_EPS)
         * params["bn_gamma"][None, :] + params["bn_beta"][None, :])
    return z @ params["fc_w"].T + params["fc_b"][None, :]


def _xavier(key, shape, fan_in, fan_out):
    a = math.sqrt(6.0 / (fan_in + fan_out))
    return jax.random.uniform(key, shape, jnp.float32, -a, a)


def init_params(key, e2e, e2n, n2g, d):
    ks = jax.random.split(key, 16)
    p = {}
    p["e2e_row_w"] = _xavier(ks[0], (e2e, 1, 1, d), 1 * d, e2e * d)
    p["e2e_row_b"] = jax.random.uniform(ks[1], (e2e,), jnp.float32, -0.1, 0.1)
    p["e2e_col_w"] = _xavier(ks[2], (e2e, 1, d, 1), 1 * d, e2e * d)
    p["e2e_col_b"] = jax.random.uniform(ks[3], (e2e,), jnp.float32, -0.1, 0.1)
    p["e2n_row_w"] = _xavier(ks[4], (e2n, e2e, 1, d), e2e * d, e2n * d)
    p["e2n_row_b"] = jax.random.uniform(ks[5], (e2n,), jnp.float32, -0.1, 0.1)
    p["e2n_col_w"] = _xavier(ks[6], (e2n, e2e, d, 1), e2e * d, e2n * d)
    p["e2n_col_b"] = jax.random.uniform(ks[7], (e2n,), jnp.float32, -0.1, 0.1)
    p["n2g_w"] = _xavier(ks[8], (n2g, e2n, d, 1), e2n * d, n2g * d)
    p["n2g_b"] = jax.random.uniform(ks[9], (n2g,), jnp.float32, -0.1, 0.1)
    p["fc_w"] = _xavier(ks[10], (1, n2g), n2g, 1)
    p["fc_b"] = jax.random.uniform(ks[11], (1,), jnp.float32, -0.1, 0.1)
    p["bn_gamma"] = jax.random.uniform(ks[12], (n2g,), jnp.float32, 0.5, 1.5)
    p["bn_beta"] = jax.random.uniform(ks[13], (n2g,), jnp.float32, -0.2, 0.2)
    p["bn_mean"] = 0.1 * jax.random.normal(ks[14], (n2g,), jnp.float32)
    p["bn_var"] = jax.random.uniform(ks[15], (n2g,), jnp.float32, 0.5, 1.5)
    return p


if __name__ == "__main__":
    B, d = 1000, 16           # f_size = 16; B not a multiple of TB -> exercises padding
    e2e, e2n, n2g = 8, 8, 4
    key = jax.random.PRNGKey(0)
    kx, kp = jax.random.split(key)
    x = jax.random.normal(kx, (B, 1, d, d), dtype=jnp.float32)
    params = init_params(kp, e2e, e2n, n2g, d)

    out = jax.block_until_ready(bcnn_forward(x, params))   # auto TB=256, 4 grid steps
    assert out.shape == (B, 1), out.shape

    # (1) Tight check: kernel vs the bf16-exact collapsed GEMV it implements
    #     (bf16 x bf16 products are exact in f32, so only summation order differs).
    w8, b_tot = _fold_params(params, d)
    xq = x.reshape(B, d * d).astype(jnp.bfloat16).astype(jnp.float32)
    ref_gemv = (jnp.einsum("bk,k->b", xq, w8[0].astype(jnp.float32),
                           precision=HP)[:, None] + b_tot)
    assert jnp.allclose(out, ref_gemv, rtol=1e-3, atol=1e-3)

    # (2) End-to-end check vs the literal f32 layer-by-layer reference; the
    #     tolerance budget is the deliberate bf16 x / W quantization
    #     (~sqrt(K) * 2^-9 * |x|.|W| ~ 1e-2 at these magnitudes).
    ref = jax.block_until_ready(bcnn_reference(x, params))
    assert jnp.allclose(out, ref, rtol=2e-2, atol=4e-2)

    print("KERNEL_OK")
</pallas_src>

<mosaic_0001>
module attributes {stable_mosaic.version = 11 : i64} {
  func.func @_gemv_kernel(%arg0: i32, %arg1: memref<256x256xbf16, #tpu.memory_space<vmem>>, %arg2: memref<8x256xbf16, #tpu.memory_space<vmem>>, %arg3: memref<1x1xf32, #tpu.memory_space<smem>>, %arg4: memref<1x256xf32, #tpu.memory_space<vmem>>) attributes {dimension_semantics = [#tpu.dimension_semantics<parallel>], iteration_bounds = array<i64: 4>, scalar_prefetch = 0 : i64, scratch_operands = 0 : i64, tpu.core_type = #tpu.core_type<tc>, window_params = [{transform_indices = @transform_0, window_bounds = array<i64: 256, 256>}, {pipeline_mode = #tpu.pipeline_mode<synchronous>, transform_indices = @transform_1, window_bounds = array<i64: 8, 256>}, {transform_indices = @transform_2, window_bounds = array<i64: 1, 1>}, {transform_indices = @transform_3, window_bounds = array<i64: 1, 256>}]} {
    %c0 = arith.constant 0 : index
    %c0_0 = arith.constant 0 : index
    %0 = vector.load %arg2[%c0, %c0_0] : memref<8x256xbf16, #tpu.memory_space<vmem>>, vector<8x256xbf16>
    %c0_1 = arith.constant 0 : index
    %c0_2 = arith.constant 0 : index
    %1 = vector.load %arg1[%c0_1, %c0_2] : memref<256x256xbf16, #tpu.memory_space<vmem>>, vector<256x256xbf16>
    %cst = arith.constant dense<0.000000e+00> : vector<8x256xf32>
    %2 = tpu.matmul %0, %1, %cst {dimension_numbers = #tpu.dot_dimension_numbers<[1], [1], [0], [0], [0, 0, 1, 0], [], []>} : vector<8x256xbf16>, vector<256x256xbf16>, vector<8x256xf32> -> vector<8x256xf32>
    %3 = vector.extract_strided_slice %2 {offsets = [0, 0], sizes = [1, 256], strides = [1, 1]} : vector<8x256xf32> to vector<1x256xf32>
    %c0_3 = arith.constant 0 : index
    %c0_4 = arith.constant 0 : index
    %4 = memref.load %arg3[%c0_3, %c0_4] : memref<1x1xf32, #tpu.memory_space<smem>>
    %5 = vector.broadcast %4 : f32 to vector<1x256xf32>
    %6 = arith.addf %3, %5 : vector<1x256xf32>
    %c0_5 = arith.constant 0 : index
    %c0_6 = arith.constant 0 : index
    %7 = vector.load %arg4[%c0_5, %c0_6] : memref<1x256xf32, #tpu.memory_space<vmem>>, vector<1x256xf32>
    tpu.vector_store %arg4[%c0_5, %c0_6], %6 {strides = array<i32>} : memref<1x256xf32, #tpu.memory_space<vmem>>, vector<1x256xf32>,
    return
  }
  func.func @transform_0(%arg0: i32) -> (i32, i32) {
    %c0_i32 = arith.constant 0 : i32
    %c0_i32_0 = arith.constant 0 : i32
    return %arg0, %c0_i32 : i32, i32
  }
  func.func @transform_1(%arg0: i32) -> (i32, i32) {
    %c0_i32 = arith.constant 0 : i32
    %c0_i32_0 = arith.constant 0 : i32
    %c0_i32_1 = arith.constant 0 : i32
    return %c0_i32, %c0_i32_0 : i32, i32
  }
  func.func @transform_2(%arg0: i32) -> (i32, i32) {
    %c0_i32 = arith.constant 0 : i32
    %c0_i32_0 = arith.constant 0 : i32
    %c0_i32_1 = arith.constant 0 : i32
    return %c0_i32, %c0_i32_0 : i32, i32
  }
  func.func @transform_3(%arg0: i32) -> (i32, i32) {
    %c0_i32 = arith.constant 0 : i32
    %c0_i32_0 = arith.constant 0 : i32
    return %c0_i32, %arg0 : i32, i32
  }
}

</mosaic_0001>

<llo_original>
// kernel: tpu_custom_call.1
$region0: #{tpu_custom_call.1}
  #allocation0 [shape = 'u32[]', space=smem, size = 0x4, offset = 0x4, fixed_abs, tag = 'smem constant byte address 0x4 - core index']
  #allocation1 [shape = 'u32[72,128]{1,0:T(1,128)}', space=vmem, size = 0x9000, scoped, tag = 'internal scratch']
  #allocation2 [shape = 'f32[1,1]{1,0:T(1,128)S(6)}', space=smem, size = 0x200, scoped, tag = 'scoped memory for tpu_custom_call.1']
  %s0 = inlined_call_operand.hbm [shape: bf16[1024,256], index: 0, kind: input, shape index: {}]
  %s1 = inlined_call_operand.hbm [shape: bf16[8,256], index: 1, kind: input, shape index: {}]
  %s2 = inlined_call_operand.<no memory space> [shape: f32[1,1], index: 2, kind: input, shape index: {}]
  %s3 = inlined_call_operand.hbm [shape: f32[1,1024], index: 3, kind: output, shape index: {}]
  %s4 = sld [smem:[#allocation0]]
  $region53: #{tpu_custom_call.1} parent=0
    _
  %s6 = ssub.s32 1, %s4
  %s7 = scalar_select 0, %s6, %s4
  %8 = sst [smem:[#allocation2]] %s2
  $region1: #{tpu_custom_call.1} parent=0
    #allocation3 [shape = 'u8[262144]{0}', space=vmem, size = 0x40000, scoped, tag = 'input window, operand 0']
    #allocation4 [shape = 's32[2]{0}', space=sflag, size = 0x8, scoped, tag = 'scoped memory for tpu_custom_call.1']
    #allocation5 [shape = 's32[2]{0}', space=sflag, size = 0x8, scoped, tag = 'scoped memory for tpu_custom_call.1']
    #allocation6 [shape = 'u8[4096]{0}', space=vmem, size = 0x1000, scoped, tag = 'input window, operand 1, single buffered']
    #allocation7 [shape = 's32[1]{0}', space=sflag, size = 0x4, scoped, tag = 'scoped memory for tpu_custom_call.1']
    #allocation8 [shape = 'u8[2048]{0}', space=vmem, size = 0x800, scoped, tag = 'output window, operand 0']
    %9 = vsyncpa [#allocation4], 0
    %s10 = scalar_lea.sflag [#allocation4], 1
    %11 = vsyncpa %s10, 0
    %12 = vsyncpa [#allocation7], 0
    %13 = vsyncpa [#allocation5], 0
    %s14 = scalar_lea.sflag [#allocation5], 1
    %15 = vsyncpa %s14, 0
    loop: start=0, step=1, limit=6
    $region2: #{tpu_custom_call.1} parent=1 // loop_pre_header
      _
    $region3: #{tpu_custom_call.1} parent=1 // loop_header
      %s17 = sphi 0, %s21
      %p18 = scmp.ge.s32.totalorder %s17, 6
      %s27 = sphi 0, %s29
      %s30 = sphi 0, %s27
      %s31 = sphi 0, %s30
      %s47 = sphi 0, %s31
      %s51 = sphi 0, %s51
      %s53 = sphi 0, %s51
      %s54 = sphi 0, %s53
      %s68 = sphi 0, %s54
      %s72 = sphi 0, %s72
      %s74 = sphi 0, %s72
      %s75 = sphi 0, %s74
      %s89 = sphi 0, %s75
      %s95 = sphi 0, %s97
      %s98 = sphi 0, %s95
      %s99 = sphi 0, %s98
      %s115 = sphi 0, %s99
    $region4: #{tpu_custom_call.1} parent=1 // loop_header_branch
      %20 = sbr.rel (%p18) target = $region8
    $region5: #{tpu_custom_call.1} parent=1 // loop_body
      %s22 = ssub.s32 %s17, 1
      %s23 = ssub.s32 %s17, 2
      %s24 = sadd.s32 %s17, 1
      %s25 = ssub.s32 %s17, %s24
      %p26 = scmp.eq.s32.totalorder %s25, 0
      %s28 = sadd.s32 %s27, 1
      %s29 = scalar_select %p26, %s27, %s28
      %p32 = pneg %p26
      %p33 = scmp.eq.s32.totalorder %s17, 3
      %p34 = por %p32, %p33
      %p35 = scmp.ne.s32.totalorder %s27, %s30
      %p36 = scmp.eq.s32.totalorder %s17, 0
      %p37 = por %p35, %p36
      %p38 = scmp.ne.s32.totalorder %s27, %s30
      %p39 = scmp.eq.s32.totalorder %s22, 3
      %p40 = por %p38, %p39
      %p41 = scmp.ne.s32.totalorder %s30, %s31
      %p42 = scmp.eq.s32.totalorder %s22, 0
      %p43 = por %p41, %p42
      %p44 = scmp.ne.s32.totalorder %s30, %s31
      %p45 = scmp.eq.s32.totalorder %s23, 3
      %p46 = por %p44, %p45
      %p48 = scmp.ne.s32.totalorder %s31, %s47
      %p49 = scmp.eq.s32.totalorder %s23, 0
      %p50 = por %p48, %p49
      %s52 = sadd.s32 %s51, 1
      %p55 = scmp.eq.s32.totalorder %s17, 3
      %p56 = scmp.ne.s32.totalorder %s51, %s53
      %p57 = scmp.eq.s32.totalorder %s17, 0
      %p58 = por %p56, %p57
      %p59 = scmp.ne.s32.totalorder %s51, %s53
      %p60 = scmp.eq.s32.totalorder %s22, 3
      %p61 = por %p59, %p60
      %p62 = scmp.ne.s32.totalorder %s53, %s54
      %p63 = scmp.eq.s32.totalorder %s22, 0
      %p64 = por %p62, %p63
      %p65 = scmp.ne.s32.totalorder %s53, %s54
      %p66 = scmp.eq.s32.totalorder %s23, 3
      %p67 = por %p65, %p66
      %p69 = scmp.ne.s32.totalorder %s54, %s68
      %p70 = scmp.eq.s32.totalorder %s23, 0
      %p71 = por %p69, %p70
      %s73 = sadd.s32 %s72, 1
      %p76 = scmp.eq.s32.totalorder %s17, 3
      %p77 = scmp.ne.s32.totalorder %s72, %s74
      %p78 = scmp.eq.s32.totalorder %s17, 0
      %p79 = por %p77, %p78
      %p80 = scmp.ne.s32.totalorder %s72, %s74
      %p81 = scmp.eq.s32.totalorder %s22, 3
      %p82 = por %p80, %p81
      %p83 = scmp.ne.s32.totalorder %s74, %s75
      %p84 = scmp.eq.s32.totalorder %s22, 0
      %p85 = por %p83, %p84
      %p86 = scmp.ne.s32.totalorder %s74, %s75
      %p87 = scmp.eq.s32.totalorder %s23, 3
      %p88 = por %p86, %p87
      %p90 = scmp.ne.s32.totalorder %s75, %s89
      %p91 = scmp.eq.s32.totalorder %s23, 0
      %p92 = por %p90, %p91
      %s93 = ssub.s32 %s17, %s24
      %p94 = scmp.eq.s32.totalorder %s93, 0
      %s96 = sadd.s32 %s95, 1
      %s97 = scalar_select %p94, %s95, %s96
      %p100 = pneg %p94
      %p101 = scmp.eq.s32.totalorder %s17, 3
      %p102 = por %p100, %p101
      %p103 = scmp.ne.s32.totalorder %s95, %s98
      %p104 = scmp.eq.s32.totalorder %s17, 0
      %p105 = por %p103, %p104
      %p106 = scmp.ne.s32.totalorder %s95, %s98
      %p107 = scmp.eq.s32.totalorder %s22, 3
      %p108 = por %p106, %p107
      %p109 = scmp.ne.s32.totalorder %s98, %s99
      %p110 = scmp.eq.s32.totalorder %s22, 0
      %p111 = por %p109, %p110
      %p112 = scmp.ne.s32.totalorder %s98, %s99
      %p113 = scmp.eq.s32.totalorder %s23, 3
      %p114 = por %p112, %p113
      %p116 = scmp.ne.s32.totalorder %s99, %s115
      %p117 = scmp.eq.s32.totalorder %s23, 0
      %p118 = por %p116, %p117
      %p119 = scmp.le.s32.totalorder 1, %s17
      %p120 = scmp.lt.s32.totalorder %s17, 5
      %p121 = pnand %p119, %p120
      %p122 = pneg %p121
      // Predicated region
      $region9: #{tpu_custom_call.1} parent=5 // pred_check
        _
      $region10: #{tpu_custom_call.1} parent=5 // pred_check_branch
        %124 = sbr.rel (%p121) target = $region12
      $region11: #{tpu_custom_call.1} parent=5 // pred_region
        %s125 = ssub.s32 %s17, 1
        // Predicated region
        $region13: #{tpu_custom_call.1} parent=11 // pred_check
          %p126 = pneg %p64
        $region14: #{tpu_custom_call.1} parent=11 // pred_check_branch
          %128 = sbr.rel (%p126) target = $region16
        $region15: #{tpu_custom_call.1} parent=11 // pred_region
          %130 = vsyncadd [#allocation7], 0
          %s132 = sshll.u32 %s1, 4
          %s133 = int_to_ptr.hbm [resolvable:$true] %s132
          %s134 = sshll.u32 [#allocation6], 4
          %s135 = int_to_ptr.vmem [resolvable:$true] %s134
          %137 = dma.hbm_to_vmem [thread:$0]  %s133, 128, %s135, [#allocation7]
        $region16: #{tpu_custom_call.1} parent=11 // pred_fallthru
          _
        // Predicated region
        $region17: #{tpu_custom_call.1} parent=11 // pred_check
          %p138 = pneg %p85
        $region18: #{tpu_custom_call.1} parent=11 // pred_check_branch
          %140 = sbr.rel (%p138) target = $region20
        $region19: #{tpu_custom_call.1} parent=11 // pred_region
          _
        $region20: #{tpu_custom_call.1} parent=11 // pred_fallthru
          _
      $region12: #{tpu_custom_call.1} parent=5 // pred_fallthru
        _
      %p141 = scmp.lt.s32.totalorder %s17, 4
      // Predicated region
      $region21: #{tpu_custom_call.1} parent=5 // pred_check
        %p142 = pneg %p141
      $region22: #{tpu_custom_call.1} parent=5 // pred_check_branch
        %144 = sbr.rel (%p142) target = $region24
      $region23: #{tpu_custom_call.1} parent=5 // pred_region
        // Predicated region
        $region25: #{tpu_custom_call.1} parent=23 // pred_check
          %p145 = pneg %p37
        $region26: #{tpu_custom_call.1} parent=23 // pred_check_branch
          %147 = sbr.rel (%p145) target = $region28
        $region27: #{tpu_custom_call.1} parent=23 // pred_region
          %s148 = sand.u32 %s27, 1
          %s149 = scalar_lea.sflag [#allocation4], %s148
          %s150 = sand.u32 %s27, 1
          %s151 = smul.addr %s150, 256
          %s152 = scalar_lea.vmem [#allocation3], %s151
          %s153 = smul.u32 32, %s17
          %155 = vsyncadd %s149, 0
          %s156 = smul.addr %s153, 2
          %s157 = smul.addr %s156, 4
          %s158 = scalar_lea.hbm %s0, %s157
          %s159 = sshll.u32 %s158, 4
          %s160 = int_to_ptr.hbm [resolvable:$true] %s159
          %s161 = sshll.u32 %s152, 4
          %s162 = int_to_ptr.vmem [resolvable:$true] %s161
          %167 = dma.hbm_to_vmem [thread:$0]  %s160, 4096, %s162, %s149, 128, 128, 8
        $region28: #{tpu_custom_call.1} parent=23 // pred_fallthru
          _
      $region24: #{tpu_custom_call.1} parent=5 // pred_fallthru
        _
      %p168 = scmp.le.s32.totalorder 1, %s17
      %p169 = scmp.lt.s32.totalorder %s17, 5
      %p170 = pnand %p168, %p169
      %p171 = pneg %p170
      // Predicated region
      $region29: #{tpu_custom_call.1} parent=5 // pred_check
        _
      $region30: #{tpu_custom_call.1} parent=5 // pred_check_branch
        %173 = sbr.rel (%p170) target = $region32
      $region31: #{tpu_custom_call.1} parent=5 // pred_region
        %s174 = ssub.s32 %s17, 1
        %s175 = sand.u32 %s30, 1
        %s176 = scalar_lea.sflag [#allocation4], %s175
        %s177 = sand.u32 %s30, 1
        %s178 = smul.addr %s177, 256
        %s179 = scalar_lea.vmem [#allocation3], %s178
        // Predicated region
        $region33: #{tpu_custom_call.1} parent=31 // pred_check
          %p180 = pneg %p43
        $region34: #{tpu_custom_call.1} parent=31 // pred_check_branch
          %182 = sbr.rel (%p180) target = $region36
        $region35: #{tpu_custom_call.1} parent=31 // pred_region
          %184 = dma.done %s176, 4096
        $region36: #{tpu_custom_call.1} parent=31 // pred_fallthru
          _
        // Predicated region
        $region37: #{tpu_custom_call.1} parent=31 // pred_check
          %p185 = pneg %p64
        $region38: #{tpu_custom_call.1} parent=31 // pred_check_branch
          %187 = sbr.rel (%p185) target = $region40
        $region39: #{tpu_custom_call.1} parent=31 // pred_region
          %189 = dma.done [#allocation7], 128
        $region40: #{tpu_custom_call.1} parent=31 // pred_fallthru
          _
        %s190 = sand.u32 %s30, 1
        %s191 = scalar_lea.sflag [#allocation4], %s190
        %s192 = sand.u32 %s30, 1
        %s193 = smul.addr %s192, 256
        %s194 = scalar_lea.vmem [#allocation3], %s193
        %p195 = pneg %p43
        %p196 = pneg %p40
        %p197 = pneg %p64
        %p198 = pneg %p61
        %p199 = pneg %p85
        %p200 = pneg %p82
        %p201 = pneg %p111
        %p202 = pneg %p108
        %s203 = sand.u32 %s98, 1
        %s204 = scalar_lea.sflag [#allocation5], %s203
        %s205 = sand.u32 %s98, 1
        %s206 = smul.addr %s205, 2
        %s207 = scalar_lea.vmem [#allocation8], %s206
        %s208 = smul.u32 32, %s22
        %s209 = smul.u32 2, %s22
        %v210 = vld [vmem:[#allocation6] sm:$0xff]
        %v211 = vld [vmem:[%s179] sm:$0xff]
        %v212 = vld [vmem:[%s179 + $0x8] sm:$0xff]
        %v213 = vld [vmem:[%s179 + $0x10] sm:$0xff]
        %v214 = vld [vmem:[%s179 + $0x18] sm:$0xff]
        %v215 = vld [vmem:[%s179 + $0x20] sm:$0xff]
        %v216 = vld [vmem:[%s179 + $0x28] sm:$0xff]
        %v217 = vld [vmem:[%s179 + $0x30] sm:$0xff]
        %v218 = vld [vmem:[%s179 + $0x38] sm:$0xff]
        %v219 = vld [vmem:[%s179 + $0x40] sm:$0xff]
        %v220 = vld [vmem:[%s179 + $0x48] sm:$0xff]
        %v221 = vld [vmem:[%s179 + $0x50] sm:$0xff]
        %v222 = vld [vmem:[%s179 + $0x58] sm:$0xff]
        %v223 = vld [vmem:[%s179 + $0x60] sm:$0xff]
        %v224 = vld [vmem:[%s179 + $0x68] sm:$0xff]
        %v225 = vld [vmem:[%s179 + $0x70] sm:$0xff]
        %v226 = vld [vmem:[%s179 + $0x78] sm:$0xff]
        %v227 = vld [vmem:[%s179 + $0x80] sm:$0xff]
        %v228 = vld [vmem:[%s179 + $0x88] sm:$0xff]
        %v229 = vld [vmem:[%s179 + $0x90] sm:$0xff]
        %v230 = vld [vmem:[%s179 + $0x98] sm:$0xff]
        %v231 = vld [vmem:[%s179 + $0xa0] sm:$0xff]
        %v232 = vld [vmem:[%s179 + $0xa8] sm:$0xff]
        %v233 = vld [vmem:[%s179 + $0xb0] sm:$0xff]
        %v234 = vld [vmem:[%s179 + $0xb8] sm:$0xff]
        %v235 = vld [vmem:[%s179 + $0xc0] sm:$0xff]
        %v236 = vld [vmem:[%s179 + $0xc8] sm:$0xff]
        %v237 = vld [vmem:[%s179 + $0xd0] sm:$0xff]
        %v238 = vld [vmem:[%s179 + $0xd8] sm:$0xff]
        %v239 = vld [vmem:[%s179 + $0xe0] sm:$0xff]
        %v240 = vld [vmem:[%s179 + $0xe8] sm:$0xff]
        %v241 = vld [vmem:[%s179 + $0xf0] sm:$0xff]
        %v242 = vld [vmem:[%s179 + $0xf8] sm:$0xff]
        %v244 = vunpack.c.l.b16 %v210
        %v245 = vunpack.c.h.b16 %v210
        %v246 = vpack.c.b16 %v244, %v244
        %v247 = vpack.c.b16 %v245, %v245
        %v282 = vunpack.c.l.b16 %v211
        %v283 = vunpack.c.h.b16 %v211
        %v284 = vunpack.c.l.b16 %v212
        %v285 = vunpack.c.h.b16 %v212
        %v286 = vunpack.c.l.b16 %v213
        %v287 = vunpack.c.h.b16 %v213
        %v288 = vunpack.c.l.b16 %v214
        %v289 = vunpack.c.h.b16 %v214
        %v290 = vunpack.c.l.b16 %v215
        %v291 = vunpack.c.h.b16 %v215
        %v292 = vunpack.c.l.b16 %v216
        %v293 = vunpack.c.h.b16 %v216
        %v294 = vunpack.c.l.b16 %v217
        %v295 = vunpack.c.h.b16 %v217
        %v296 = vunpack.c.l.b16 %v218
        %v297 = vunpack.c.h.b16 %v218
        %v298 = vunpack.c.l.b16 %v219
        %v299 = vunpack.c.h.b16 %v219
        %v300 = vunpack.c.l.b16 %v220
        %v301 = vunpack.c.h.b16 %v220
        %v302 = vunpack.c.l.b16 %v221
        %v303 = vunpack.c.h.b16 %v221
        %v304 = vunpack.c.l.b16 %v222
        %v305 = vunpack.c.h.b16 %v222
        %v306 = vunpack.c.l.b16 %v223
        %v307 = vunpack.c.h.b16 %v223
        %v308 = vunpack.c.l.b16 %v224
        %v309 = vunpack.c.h.b16 %v224
        %v310 = vunpack.c.l.b16 %v225
        %v311 = vunpack.c.h.b16 %v225
        %v312 = vunpack.c.l.b16 %v226
        %v313 = vunpack.c.h.b16 %v226
        %v314 = vunpack.c.l.b16 %v227
        %v315 = vunpack.c.h.b16 %v227
        %v316 = vunpack.c.l.b16 %v228
        %v317 = vunpack.c.h.b16 %v228
        %v318 = vunpack.c.l.b16 %v229
        %v319 = vunpack.c.h.b16 %v229
        %v320 = vunpack.c.l.b16 %v230
        %v321 = vunpack.c.h.b16 %v230
        %v322 = vunpack.c.l.b16 %v231
        %v323 = vunpack.c.h.b16 %v231
        %v324 = vunpack.c.l.b16 %v232
        %v325 = vunpack.c.h.b16 %v232
        %v326 = vunpack.c.l.b16 %v233
        %v327 = vunpack.c.h.b16 %v233
        %v328 = vunpack.c.l.b16 %v234
        %v329 = vunpack.c.h.b16 %v234
        %v330 = vunpack.c.l.b16 %v235
        %v331 = vunpack.c.h.b16 %v235
        %v332 = vunpack.c.l.b16 %v236
        %v333 = vunpack.c.h.b16 %v236
        %v334 = vunpack.c.l.b16 %v237
        %v335 = vunpack.c.h.b16 %v237
        %v336 = vunpack.c.l.b16 %v238
        %v337 = vunpack.c.h.b16 %v238
        %v338 = vunpack.c.l.b16 %v239
        %v339 = vunpack.c.h.b16 %v239
        %v340 = vunpack.c.l.b16 %v240
        %v341 = vunpack.c.h.b16 %v240
        %v342 = vunpack.c.l.b16 %v241
        %v343 = vunpack.c.h.b16 %v241
        %v344 = vunpack.c.l.b16 %v242
        %v345 = vunpack.c.h.b16 %v242
        %v346 = vpack.c.b16 %v284, %v282
        %v347 = vpack.c.b16 %v285, %v283
        %v348 = vpack.c.b16 %v288, %v286
        %v349 = vpack.c.b16 %v289, %v287
        %v350 = vpack.c.b16 %v292, %v290
        %v351 = vpack.c.b16 %v293, %v291
        %v352 = vpack.c.b16 %v296, %v294
        %v353 = vpack.c.b16 %v297, %v295
        %v354 = vpack.c.b16 %v300, %v298
        %v355 = vpack.c.b16 %v301, %v299
        %v356 = vpack.c.b16 %v304, %v302
        %v357 = vpack.c.b16 %v305, %v303
        %v358 = vpack.c.b16 %v308, %v306
        %v359 = vpack.c.b16 %v309, %v307
        %v360 = vpack.c.b16 %v312, %v310
        %v361 = vpack.c.b16 %v313, %v311
        %v362 = vpack.c.b16 %v316, %v314
        %v363 = vpack.c.b16 %v317, %v315
        %v364 = vpack.c.b16 %v320, %v318
        %v365 = vpack.c.b16 %v321, %v319
        %v366 = vpack.c.b16 %v324, %v322
        %v367 = vpack.c.b16 %v325, %v323
        %v368 = vpack.c.b16 %v328, %v326
        %v369 = vpack.c.b16 %v329, %v327
        %v370 = vpack.c.b16 %v332, %v330
        %v371 = vpack.c.b16 %v333, %v331
        %v372 = vpack.c.b16 %v336, %v334
        %v373 = vpack.c.b16 %v337, %v335
        %v374 = vpack.c.b16 %v340, %v338
        %v375 = vpack.c.b16 %v341, %v339
        %v376 = vpack.c.b16 %v344, %v342
        %v377 = vpack.c.b16 %v345, %v343
        %410 = vmatpush.bf16.xpose.msra.mxu0 %v360
        %411 = vmatpush.bf16.xpose.msra.mxu0 %v358
        %412 = vmatpush.bf16.xpose.msra.mxu0 %v356
        %413 = vmatpush.bf16.xpose.msra.mxu0 %v354
        %414 = vmatpush.bf16.xpose.msra.mxu0 %v352
        %415 = vmatpush.bf16.xpose.msra.mxu0 %v350
        %416 = vmatpush.bf16.xpose.msra.mxu0 %v348
        %417 = vmatpush.bf16.xpose.msra.mxu0 %v346
        %418 = vmatmul.bf16.gmra.mxu0 %v246
        %v419 = vpop.f32.mrf.mxu0
        %v420 = vadd.f32 0.0, %v419
        %v421 = vpop.f32.mrf.mxu0
        %422 = vdwg.mxu0
        %423 = vmatpush.bf16.xpose.msra.mxu0 %v361
        %424 = vmatpush.bf16.xpose.msra.mxu0 %v359
        %425 = vmatpush.bf16.xpose.msra.mxu0 %v357
        %426 = vmatpush.bf16.xpose.msra.mxu0 %v355
        %427 = vmatpush.bf16.xpose.msra.mxu0 %v353
        %428 = vmatpush.bf16.xpose.msra.mxu0 %v351
        %429 = vmatpush.bf16.xpose.msra.mxu0 %v349
        %430 = vmatpush.bf16.xpose.msra.mxu0 %v347
        %431 = vmatmul.bf16.gmra.mxu0 %v247
        %v432 = vpop.f32.mrf.mxu0
        %v433 = vadd.f32 %v420, %v432
        %v434 = vpop.f32.mrf.mxu0
        %435 = vdwg.mxu0
        %436 = vmatpush.bf16.xpose.msra.mxu0 %v376
        %437 = vmatpush.bf16.xpose.msra.mxu0 %v374
        %438 = vmatpush.bf16.xpose.msra.mxu0 %v372
        %439 = vmatpush.bf16.xpose.msra.mxu0 %v370
        %440 = vmatpush.bf16.xpose.msra.mxu0 %v368
        %441 = vmatpush.bf16.xpose.msra.mxu0 %v366
        %442 = vmatpush.bf16.xpose.msra.mxu0 %v364
        %443 = vmatpush.bf16.xpose.msra.mxu0 %v362
        %444 = vmatmul.bf16.gmra.mxu0 %v246
        %v445 = vpop.f32.mrf.mxu0
        %v446 = vadd.f32 0.0, %v445
        %v447 = vpop.f32.mrf.mxu0
        %448 = vdwg.mxu0
        %449 = vmatpush.bf16.xpose.msra.mxu0 %v377
        %450 = vmatpush.bf16.xpose.msra.mxu0 %v375
        %451 = vmatpush.bf16.xpose.msra.mxu0 %v373
        %452 = vmatpush.bf16.xpose.msra.mxu0 %v371
        %453 = vmatpush.bf16.xpose.msra.mxu0 %v369
        %454 = vmatpush.bf16.xpose.msra.mxu0 %v367
        %455 = vmatpush.bf16.xpose.msra.mxu0 %v365
        %456 = vmatpush.bf16.xpose.msra.mxu0 %v363
        %457 = vmatmul.bf16.gmra.mxu0 %v247
        %v458 = vpop.f32.mrf.mxu0
        %v459 = vadd.f32 %v446, %v458
        %v460 = vpop.f32.mrf.mxu0
        %461 = vdwg.mxu0
        %s462 = sld [smem:[#allocation2]]
        %v463 = vstv %s462
        %v464 = vadd.f32 %v433, %v463
        %v465 = vadd.f32 %v459, %v463
        %v468 = vrot.slane %v465, 7
        %vm469 = vcmask 1040384
        %v470 = vsel %vm469, %v464, %v468
        %v472 = vlaneseq
        %vm473 = vcmp.ge.s32.totalorder %v472, 0
        %vm474 = vcmp.lt.s32.totalorder %v472, 256
        %vm475 = vmand %vm473, %vm474
        %476 = vst.msk [vmem:[%s207] sm:$0x3] %vm475, %v470
        %s477 = sand.u32 %s98, 1
        %s478 = scalar_lea.sflag [#allocation5], %s477
        %s479 = sand.u32 %s98, 1
        %s480 = smul.addr %s479, 2
        %s481 = scalar_lea.vmem [#allocation8], %s480
        // Predicated region
        $region41: #{tpu_custom_call.1} parent=31 // pred_check
          %p482 = pneg %p108
        $region42: #{tpu_custom_call.1} parent=31 // pred_check_branch
          %484 = sbr.rel (%p482) target = $region44
        $region43: #{tpu_custom_call.1} parent=31 // pred_region
          %s485 = smul.u32 2, %s22
          %487 = vsyncadd %s478, 0
          %s488 = scalar_lea.hbm %s3, %s485
          %s490 = sshll.u32 %s481, 4
          %s491 = int_to_ptr.vmem [resolvable:$true] %s490
          %s492 = sshll.u32 %s488, 4
          %s493 = int_to_ptr.hbm [resolvable:$true] %s492
          %495 = dma.vmem_to_hbm [thread:$0]  %s491, 32, %s493, %s478
        $region44: #{tpu_custom_call.1} parent=31 // pred_fallthru
          _
      $region32: #{tpu_custom_call.1} parent=5 // pred_fallthru
        _
      %p496 = scmp.le.s32.totalorder 2, %s17
      // Predicated region
      $region45: #{tpu_custom_call.1} parent=5 // pred_check
        %p497 = pneg %p496
      $region46: #{tpu_custom_call.1} parent=5 // pred_check_branch
        %499 = sbr.rel (%p497) target = $region48
      $region47: #{tpu_custom_call.1} parent=5 // pred_region
        %s500 = ssub.s32 %s17, 2
        // Predicated region
        $region49: #{tpu_custom_call.1} parent=47 // pred_check
          %p501 = pneg %p114
        $region50: #{tpu_custom_call.1} parent=47 // pred_check_branch
          %503 = sbr.rel (%p501) target = $region52
        $region51: #{tpu_custom_call.1} parent=47 // pred_region
          %s504 = sand.u32 %s99, 1
          %s505 = scalar_lea.sflag [#allocation5], %s504
          %s506 = sand.u32 %s99, 1
          %s507 = smul.addr %s506, 2
          %s508 = scalar_lea.vmem [#allocation8], %s507
          %510 = dma.done %s505, 32
        $region52: #{tpu_custom_call.1} parent=47 // pred_fallthru
          _
      $region48: #{tpu_custom_call.1} parent=5 // pred_fallthru
        _
    $region6: #{tpu_custom_call.1} parent=1 // loop_footer
      %s21 = sadd.s32 1, %s17
    $region7: #{tpu_custom_call.1} parent=1 // loop_footer_branch
      %16 = sbr.rel target = $region3
    $region8: #{tpu_custom_call.1} parent=1 // loop_exit
      _
    %511 = vsyncpa [#allocation4], 1
    %s512 = scalar_lea.sflag [#allocation4], 1
    %513 = vsyncpa %s512, 1
    %514 = vsyncpa [#allocation7], 1
    %515 = vsyncpa [#allocation5], 1
    %s516 = scalar_lea.sflag [#allocation5], 1
    %517 = vsyncpa %s516, 1

</llo_original>
